<compile_context>
chip_gen: v6e
topology: v6e:2x2x1
jax: 0.10.0
libtpu: 0.0.40
codegen_flags: <defaults>
</compile_context>

<pallas_src>
import functools

import jax
import jax.numpy as jnp
from jax.experimental import pallas as pl
from jax.experimental.pallas import tpu as pltpu

OUT_LANES = 128  # lane-dense output block width


def _round_up(x, m):
    return (x + m - 1) // m * m


# --------------------------------------------------------------------------
# Kernel
# --------------------------------------------------------------------------
def _three_inputs_kernel(L1, L1P, L2, L2P,
                         title_ref, full_ref, cat_ref,          # activations
                         wct_ref, wcf_ref,                      # fused conv taps (H, 2H)
                         wc_ref, wi_ref, wfin_ref, b_ref,       # dense weights + packed biases
                         out_ref):
    f32 = jnp.float32
    H = wct_ref.shape[0]
    TB = out_ref.shape[0]
    cdt = wi_ref.dtype            # matmul compute dtype (bf16 or f32)

    # ---- unpack packed bias buffer: rows = [bt, bf, bc, bi, bfin] ----
    bt = b_ref[0:1, 0:H]          # (1, H)
    bf = b_ref[1:2, 0:H]          # (1, H)
    bc = b_ref[2:3, 0:H]          # (1, H)
    bi = b_ref[3:4, :]            # (1, 2H)
    bfin = b_ref[4:5, 0:1]        # (1, 1)

    def conv_branch(x2d, wcat, brow, L, LP):
        # x2d: (TB*LP, H) flat, 8-sublane-aligned activation slab.
        M = TB * LP
        # Single MXU pass: both conv taps fused along N -> (M, 2H) f32.
        y = jnp.dot(x2d, wcat, preferred_element_type=f32)
        y0 = y[:, :H]
        y1 = y[:, H:]
        # Bring row t+1 of the tap-1 result to row t via an XLU sublane
        # rotation (np.roll semantics: positive shift M-1 == shift -1), so no
        # unaligned time slices / VMEM retile copies are needed.
        conv = y0 + pltpu.roll(y1, shift=M - 1, axis=0) + brow   # (M, H)
        conv = jnp.maximum(conv, 0.0).reshape(TB, LP, H)          # free: LP % 8 == 0
        # Valid conv outputs are time positions 0..L-2; this also masks the
        # zero-padded tail tokens and the cross-batch wrapped row.
        t = jax.lax.broadcasted_iota(jnp.int32, (TB, LP, H), 1)
        conv = jnp.where(t < L - 1, conv, 0.0)
        # Conv1d -> ReLU -> AdaptiveAvgPool1d(1)
        return jnp.sum(conv, axis=1) * (1.0 / (L - 1))            # (TB, H) f32

    title_pool = conv_branch(title_ref[...], wct_ref[...], bt, L1, L1P)
    full_pool = conv_branch(full_ref[...], wcf_ref[...], bf, L2, L2P)

    # ---- category branch: Linear -> ReLU ----
    cat = jnp.maximum(
        jnp.dot(cat_ref[...], wc_ref[...], preferred_element_type=f32) + bc,
        0.0)                                                      # (TB, H) f32

    # ---- concat + inter_dense (single K=3H matmul) + ReLU ----
    concat = jnp.concatenate(
        [title_pool.astype(cdt), full_pool.astype(cdt), cat.astype(cdt)],
        axis=-1)                                                  # (TB, 3H)
    inter = jnp.maximum(
        jnp.dot(concat, wi_ref[...], preferred_element_type=f32) + bi,
        0.0)                                                      # (TB, 2H) f32

    # ---- final_dense (N=1) on the VPU: broadcast-mul + lane reduce ----
    final = jnp.maximum(
        jnp.sum(inter * wfin_ref[...], axis=-1, keepdims=True) + bfin,
        0.0)                                                      # (TB, 1)
    # Lane-dense store: broadcast across 128 lanes; wrapper keeps column 0.
    out_ref[...] = jnp.broadcast_to(final, out_ref.shape).astype(out_ref.dtype)


# --------------------------------------------------------------------------
# One-time parameter preprocessing (hoisted out of the forward path)
# --------------------------------------------------------------------------
def prepare_params(params, compute_dtype=jnp.bfloat16):
    """Transpose / fuse / pack weights once.

    compute_dtype applies to MXU operands only (accumulation and elementwise
    math stay float32 inside the kernel).  Default bfloat16 for ~2x MXU
    throughput and halved activation traffic on v5e/v6e/v7x.
    """
    H = params['title_emb'].shape[1]
    f32 = jnp.float32
    cdt = compute_dtype

    biases = jnp.zeros((5, 2 * H), f32)
    biases = biases.at[0, :H].set(params['title_conv_b'].astype(f32))
    biases = biases.at[1, :H].set(params['full_conv_b'].astype(f32))
    biases = biases.at[2, :H].set(params['cat_b'].astype(f32))
    biases = biases.at[3, :].set(params['inter_b'].astype(f32))
    biases = biases.at[4, 0:1].set(params['final_b'].astype(f32))

    # torch Conv1d weight (out, in, k): per-tap (in, out) matrices, fused
    # along N into a single (H, 2H) operand -> one MXU weight push per branch.
    def fuse_conv(w):
        return jnp.concatenate([w[:, :, 0].T, w[:, :, 1].T], axis=1).astype(cdt)

    return {
        # Tables stored in compute dtype so gathered activations are already
        # narrow (halves activation HBM/VMEM traffic when bf16).
        'title_emb': params['title_emb'].astype(cdt),
        'full_emb': params['full_emb'].astype(cdt),
        'wct': fuse_conv(params['title_conv_w']),                # (H, 2H)
        'wcf': fuse_conv(params['full_conv_w']),                 # (H, 2H)
        'wc': params['cat_w'].T.astype(cdt),                     # (n_cat, H)
        'wi': params['inter_w'].T.astype(cdt),                   # (3H, 2H)
        'wfin_row': params['final_w'].astype(f32),               # (1, 2H) VPU path, f32
        'biases': biases,                                        # (5, 2H) f32, packed
    }


# --------------------------------------------------------------------------
# Forward pass (wrapper + pallas_call)
# --------------------------------------------------------------------------
def three_inputs_net_forward(input1, input2, input3, prepared):
    """input1/input2: int32 token ids (B, L1)/(B, L2); input3: (B, n_cat) float."""
    H = prepared['wct'].shape[0]
    B, L1 = input1.shape
    _, L2 = input2.shape
    n_cat = input3.shape[1]
    cdt = prepared['wi'].dtype
    cdt_bytes = jnp.dtype(cdt).itemsize

    # Pad the time axis to a multiple of 8 sublanes so the flattened (B*Lp, H)
    # layout is tile-aligned (the in-kernel reshape back to 3-D is a no-op).
    L1P = _round_up(L1, 8)
    L2P = _round_up(L2, 8)
    ids1 = input1 if L1P == L1 else jnp.pad(input1, ((0, 0), (0, L1P - L1)))
    ids2 = input2 if L2P == L2 else jnp.pad(input2, ((0, 0), (0, L2P - L2)))

    # Embedding gather (wrapper glue).
    # TODO(synk): move this gather into the Pallas pipeline (scalar-prefetched
    # ids + manual DMA row gather from an HBM-resident table) to avoid the HBM
    # round trip of the gathered activations; needs a vocab-size-dependent
    # strategy, so it stays in the wrapper for now.
    title2d = jnp.take(prepared['title_emb'], ids1.reshape(-1), axis=0)  # (B*L1P, H)
    full2d = jnp.take(prepared['full_emb'], ids2.reshape(-1), axis=0)    # (B*L2P, H)
    cat = input3.astype(cdt)

    # ---- batch-tile selection: VMEM-aware and v7x-megacore friendly ----
    def footprint(tb):
        act = 2 * tb * ((L1P + L2P) * H + n_cat) * cdt_bytes       # double-buffered inputs
        tmp = 4 * tb * (L1P + L2P) * H * 4                          # f32 y / conv temporaries
        wts = 2 * (2 * (H * 2 * H) + n_cat * H + 3 * H * 2 * H
                   + 2 * H + 5 * 2 * H) * max(cdt_bytes, 4)         # resident weights (2 bufs)
        out = 2 * tb * OUT_LANES * 4
        return act + tmp + wts + out

    budget = 48 * 1024 * 1024            # headroom inside v7x's 64 MiB VMEM
    tile_b = min(B, 128)
    while tile_b > 8 and footprint(tile_b) > budget:
        tile_b = max(8, _round_up(tile_b // 2, 8))
    # TODO(synk): for very long L2, add a time-chunk grid axis for the full
    # branch with an accumulating pooled-sum scratch instead of shrinking tile_b.
    if B >= 16 and pl.cdiv(B, tile_b) < 2:
        tile_b = max(8, _round_up(pl.cdiv(B, 2), 8))   # >=2 grid steps: keep both v7x TCs busy

    grid = (pl.cdiv(B, tile_b),)
    vmem_limit = int(min(max(2 * footprint(tile_b), 32 * 1024 * 1024),
                         64 * 1024 * 1024))

    kernel = functools.partial(_three_inputs_kernel, L1, L1P, L2, L2P)

    def _resident(shape):
        # Full-array block, constant index map: weight stays in VMEM across grid.
        return pl.BlockSpec(shape, lambda b: (0,) * len(shape))

    in_specs = [
        pl.BlockSpec((tile_b * L1P, H), lambda b: (b, 0)),
        pl.BlockSpec((tile_b * L2P, H), lambda b: (b, 0)),
        pl.BlockSpec((tile_b, n_cat), lambda b: (b, 0)),
        _resident(prepared['wct'].shape),
        _resident(prepared['wcf'].shape),
        _resident(prepared['wc'].shape),
        _resident(prepared['wi'].shape),
        _resident(prepared['wfin_row'].shape),
        _resident(prepared['biases'].shape),
    ]
    out_spec = pl.BlockSpec((tile_b, OUT_LANES), lambda b: (b, 0))

    out_wide = pl.pallas_call(
        kernel,
        out_shape=jax.ShapeDtypeStruct((B, OUT_LANES), jnp.float32),
        grid=grid,
        in_specs=in_specs,
        out_specs=out_spec,
        compiler_params=pltpu.CompilerParams(
            dimension_semantics=("parallel",),
            vmem_limit_bytes=vmem_limit),
    )(title2d, full2d, cat,
      prepared['wct'], prepared['wcf'], prepared['wc'], prepared['wi'],
      prepared['wfin_row'], prepared['biases'])
    return out_wide[:, :1]


# --------------------------------------------------------------------------
# Raw (torch-layout) parameter init + pure-JAX reference
# --------------------------------------------------------------------------
def init_params(key, n_tokens, n_cat_features, hid_size):
    ks = jax.random.split(key, 12)
    f32 = jnp.float32
    return {
        'title_emb':    jax.random.normal(ks[0], (n_tokens, hid_size), f32),
        'full_emb':     jax.random.normal(ks[1], (n_tokens, hid_size), f32),
        'title_conv_w': 0.1 * jax.random.normal(ks[2], (hid_size, hid_size, 2), f32),
        'title_conv_b': 0.1 * jax.random.normal(ks[3], (hid_size,), f32),
        'full_conv_w':  0.1 * jax.random.normal(ks[4], (hid_size, hid_size, 2), f32),
        'full_conv_b':  0.1 * jax.random.normal(ks[5], (hid_size,), f32),
        'cat_w':        0.1 * jax.random.normal(ks[6], (hid_size, n_cat_features), f32),
        'cat_b':        0.1 * jax.random.normal(ks[7], (hid_size,), f32),
        'inter_w':      0.1 * jax.random.normal(ks[8], (2 * hid_size, 3 * hid_size), f32),
        'inter_b':      0.1 * jax.random.normal(ks[9], (2 * hid_size,), f32),
        'final_w':      0.1 * jax.random.normal(ks[10], (1, 2 * hid_size), f32),
        'final_b':      0.1 * jax.random.normal(ks[11], (1,), f32),
    }


def _reference_forward(input1, input2, input3, params):
    """Plain-JAX mirror of the PyTorch module (for a sanity check)."""
    def branch(ids, emb, w, b):
        x = jnp.take(emb, ids, axis=0)                      # (B, L, H) channels-last
        conv = (jnp.einsum('blc,oc->blo', x[:, :-1, :], w[:, :, 0]) +
                jnp.einsum('blc,oc->blo', x[:, 1:, :], w[:, :, 1]) +
                b[None, None, :])
        return jnp.mean(jax.nn.relu(conv), axis=1)          # conv -> ReLU -> avgpool

    title = branch(input1, params['title_emb'], params['title_conv_w'], params['title_conv_b'])
    full = branch(input2, params['full_emb'], params['full_conv_w'], params['full_conv_b'])
    cat = jax.nn.relu(input3 @ params['cat_w'].T + params['cat_b'])
    concat = jnp.concatenate([title, full, cat], axis=1)
    inter = jax.nn.relu(concat @ params['inter_w'].T + params['inter_b'])
    return jax.nn.relu(inter @ params['final_w'].T + params['final_b'])


# --------------------------------------------------------------------------
if __name__ == "__main__":
    B = 2
    L1 = 8            # title sequence length
    L2 = 12           # full-text sequence length
    N_TOKENS = 50
    N_CAT = 6
    HID = 32          # hid_size; concat_number_of_features = 3 * HID

    key = jax.random.PRNGKey(0)
    k_in1, k_in2, k_in3, k_par = jax.random.split(key, 4)

    input1 = jax.random.randint(k_in1, (B, L1), 0, N_TOKENS, dtype=jnp.int32)
    input2 = jax.random.randint(k_in2, (B, L2), 0, N_TOKENS, dtype=jnp.int32)
    input3 = jax.random.normal(k_in3, (B, N_CAT), jnp.float32)

    params = init_params(k_par, N_TOKENS, N_CAT, HID)

    # One-time preprocessing (hoisted out of the per-call path).
    # Default compute dtype is bfloat16 (MXU operands only; accumulation and
    # all elementwise math stay float32 inside the kernel).
    prepared = prepare_params(params, compute_dtype=jnp.bfloat16)

    forward = jax.jit(three_inputs_net_forward)
    out = jax.block_until_ready(forward(input1, input2, input3, prepared))

    assert out.shape == (B, 1) and out.dtype == jnp.float32
    ref = _reference_forward(input1, input2, input3, params)
    assert jnp.allclose(out, ref, rtol=2e-2, atol=2e-2), (out, ref)
    print("KERNEL_OK")
</pallas_src>

<mosaic_0001>
module attributes {stable_mosaic.version = 11 : i64} {
  func.func @_three_inputs_kernel(%arg0: i32, %arg1: memref<16x32xbf16, #tpu.memory_space<vmem>>, %arg2: memref<32x32xbf16, #tpu.memory_space<vmem>>, %arg3: memref<2x6xbf16, #tpu.memory_space<vmem>>, %arg4: memref<32x64xbf16, #tpu.memory_space<vmem>>, %arg5: memref<32x64xbf16, #tpu.memory_space<vmem>>, %arg6: memref<6x32xbf16, #tpu.memory_space<vmem>>, %arg7: memref<96x64xbf16, #tpu.memory_space<vmem>>, %arg8: memref<1x64xf32, #tpu.memory_space<vmem>>, %arg9: memref<5x64xf32, #tpu.memory_space<vmem>>, %arg10: memref<2x128xf32, #tpu.memory_space<vmem>>) attributes {dimension_semantics = [#tpu.dimension_semantics<parallel>], iteration_bounds = array<i64: 1>, scalar_prefetch = 0 : i64, scratch_operands = 0 : i64, tpu.core_type = #tpu.core_type<tc>, window_params = [{transform_indices = @transform_0, window_bounds = array<i64: 16, 32>}, {transform_indices = @transform_1, window_bounds = array<i64: 32, 32>}, {transform_indices = @transform_2, window_bounds = array<i64: 2, 6>}, {pipeline_mode = #tpu.pipeline_mode<synchronous>, transform_indices = @transform_3, window_bounds = array<i64: 32, 64>}, {pipeline_mode = #tpu.pipeline_mode<synchronous>, transform_indices = @transform_4, window_bounds = array<i64: 32, 64>}, {pipeline_mode = #tpu.pipeline_mode<synchronous>, transform_indices = @transform_5, window_bounds = array<i64: 6, 32>}, {pipeline_mode = #tpu.pipeline_mode<synchronous>, transform_indices = @transform_6, window_bounds = array<i64: 96, 64>}, {pipeline_mode = #tpu.pipeline_mode<synchronous>, transform_indices = @transform_7, window_bounds = array<i64: 1, 64>}, {pipeline_mode = #tpu.pipeline_mode<synchronous>, transform_indices = @transform_8, window_bounds = array<i64: 5, 64>}, {transform_indices = @transform_9, window_bounds = array<i64: 2, 128>}]} {
    %c0 = arith.constant 0 : index
    %c0_0 = arith.constant 0 : index
    %0 = vector.load %arg9[%c0, %c0_0] : memref<5x64xf32, #tpu.memory_space<vmem>>, vector<1x32xf32>
    %c1 = arith.constant 1 : index
    %c0_1 = arith.constant 0 : index
    %1 = vector.load %arg9[%c1, %c0_1] : memref<5x64xf32, #tpu.memory_space<vmem>>, vector<1x32xf32>
    %c2 = arith.constant 2 : index
    %c0_2 = arith.constant 0 : index
    %2 = vector.load %arg9[%c2, %c0_2] : memref<5x64xf32, #tpu.memory_space<vmem>>, vector<1x32xf32>
    %c3 = arith.constant 3 : index
    %c0_3 = arith.constant 0 : index
    %3 = vector.load %arg9[%c3, %c0_3] : memref<5x64xf32, #tpu.memory_space<vmem>>, vector<1x64xf32>
    %c4 = arith.constant 4 : index
    %c0_4 = arith.constant 0 : index
    %4 = vector.load %arg9[%c4, %c0_4] : memref<5x64xf32, #tpu.memory_space<vmem>>, vector<1x1xf32>
    %c0_5 = arith.constant 0 : index
    %c0_6 = arith.constant 0 : index
    %5 = vector.load %arg1[%c0_5, %c0_6] : memref<16x32xbf16, #tpu.memory_space<vmem>>, vector<16x32xbf16>
    %c0_7 = arith.constant 0 : index
    %c0_8 = arith.constant 0 : index
    %6 = vector.load %arg4[%c0_7, %c0_8] : memref<32x64xbf16, #tpu.memory_space<vmem>>, vector<32x64xbf16>
    %cst = arith.constant dense<0.000000e+00> : vector<16x64xf32>
    %7 = tpu.matmul %5, %6, %cst {dimension_numbers = #tpu.dot_dimension_numbers<[1], [0], [0], [1], [0, 0, 1, 1], [], []>} : vector<16x32xbf16>, vector<32x64xbf16>, vector<16x64xf32> -> vector<16x64xf32>
    %8 = vector.extract_strided_slice %7 {offsets = [0, 0], sizes = [16, 32], strides = [1, 1]} : vector<16x64xf32> to vector<16x32xf32>
    %9 = vector.extract_strided_slice %7 {offsets = [0, 32], sizes = [16, 32], strides = [1, 1]} : vector<16x64xf32> to vector<16x32xf32>
    %c15_i32 = arith.constant 15 : i32
    %10 = tpu.dynamic_rotate %9 by %c15_i32 dim 0 : vector<16x32xf32>, i32 -> vector<16x32xf32>
    %11 = arith.addf %8, %10 : vector<16x32xf32>
    %12 = vector.broadcast %0 : vector<1x32xf32> to vector<16x32xf32>
    %13 = arith.addf %11, %12 : vector<16x32xf32>
    %cst_9 = arith.constant 0.000000e+00 : f32
    %14 = vector.broadcast %cst_9 : f32 to vector<16x32xf32>
    %15 = arith.maximumf %13, %14 : vector<16x32xf32>
    %16 = vector.shape_cast %15 : vector<16x32xf32> to vector<2x8x32xf32>
    %17 = tpu.iota {dimensions = array<i32: 1>} : vector<2x8x32xi32>
    %c7_i32 = arith.constant 7 : i32
    %18 = vector.broadcast %c7_i32 : i32 to vector<2x8x32xi32>
    %19 = arith.cmpi slt, %17, %18 : vector<2x8x32xi32>
    %cst_10 = arith.constant 0.000000e+00 : f32
    %20 = vector.broadcast %cst_10 : f32 to vector<2x8x32xf32>
    %21 = arith.select %19, %16, %20 : vector<2x8x32xi1>, vector<2x8x32xf32>
    %cst_11 = arith.constant dense<0.000000e+00> : vector<2x32xf32>
    %22 = vector.multi_reduction <add>, %21, %cst_11 [1] : vector<2x8x32xf32> to vector<2x32xf32>
    %cst_12 = arith.constant 0.142857149 : f32
    %23 = vector.broadcast %cst_12 : f32 to vector<2x32xf32>
    %24 = arith.mulf %22, %23 : vector<2x32xf32>
    %c0_13 = arith.constant 0 : index
    %c0_14 = arith.constant 0 : index
    %25 = vector.load %arg2[%c0_13, %c0_14] : memref<32x32xbf16, #tpu.memory_space<vmem>>, vector<32x32xbf16>
    %c0_15 = arith.constant 0 : index
    %c0_16 = arith.constant 0 : index
    %26 = vector.load %arg5[%c0_15, %c0_16] : memref<32x64xbf16, #tpu.memory_space<vmem>>, vector<32x64xbf16>
    %cst_17 = arith.constant dense<0.000000e+00> : vector<32x64xf32>
    %27 = tpu.matmul %25, %26, %cst_17 {dimension_numbers = #tpu.dot_dimension_numbers<[1], [0], [0], [1], [0, 0, 1, 1], [], []>} : vector<32x32xbf16>, vector<32x64xbf16>, vector<32x64xf32> -> vector<32x64xf32>
    %28 = vector.extract_strided_slice %27 {offsets = [0, 0], sizes = [32, 32], strides = [1, 1]} : vector<32x64xf32> to vector<32x32xf32>
    %29 = vector.extract_strided_slice %27 {offsets = [0, 32], sizes = [32, 32], strides = [1, 1]} : vector<32x64xf32> to vector<32x32xf32>
    %c31_i32 = arith.constant 31 : i32
    %30 = tpu.dynamic_rotate %29 by %c31_i32 dim 0 : vector<32x32xf32>, i32 -> vector<32x32xf32>
    %31 = arith.addf %28, %30 : vector<32x32xf32>
    %32 = vector.broadcast %1 : vector<1x32xf32> to vector<32x32xf32>
    %33 = arith.addf %31, %32 : vector<32x32xf32>
    %cst_18 = arith.constant 0.000000e+00 : f32
    %34 = vector.broadcast %cst_18 : f32 to vector<32x32xf32>
    %35 = arith.maximumf %33, %34 : vector<32x32xf32>
    %36 = vector.shape_cast %35 : vector<32x32xf32> to vector<2x16x32xf32>
    %37 = tpu.iota {dimensions = array<i32: 1>} : vector<2x16x32xi32>
    %c11_i32 = arith.constant 11 : i32
    %38 = vector.broadcast %c11_i32 : i32 to vector<2x16x32xi32>
    %39 = arith.cmpi slt, %37, %38 : vector<2x16x32xi32>
    %cst_19 = arith.constant 0.000000e+00 : f32
    %40 = vector.broadcast %cst_19 : f32 to vector<2x16x32xf32>
    %41 = arith.select %39, %36, %40 : vector<2x16x32xi1>, vector<2x16x32xf32>
    %cst_20 = arith.constant dense<0.000000e+00> : vector<2x32xf32>
    %42 = vector.multi_reduction <add>, %41, %cst_20 [1] : vector<2x16x32xf32> to vector<2x32xf32>
    %cst_21 = arith.constant 0.0909090936 : f32
    %43 = vector.broadcast %cst_21 : f32 to vector<2x32xf32>
    %44 = arith.mulf %42, %43 : vector<2x32xf32>
    %c0_22 = arith.constant 0 : index
    %c0_23 = arith.constant 0 : index
    %45 = vector.load %arg3[%c0_22, %c0_23] : memref<2x6xbf16, #tpu.memory_space<vmem>>, vector<2x6xbf16>
    %c0_24 = arith.constant 0 : index
    %c0_25 = arith.constant 0 : index
    %46 = vector.load %arg6[%c0_24, %c0_25] : memref<6x32xbf16, #tpu.memory_space<vmem>>, vector<6x32xbf16>
    %cst_26 = arith.constant dense<0.000000e+00> : vector<2x32xf32>
    %47 = tpu.matmul %45, %46, %cst_26 {dimension_numbers = #tpu.dot_dimension_numbers<[1], [0], [0], [1], [0, 0, 1, 1], [], []>} : vector<2x6xbf16>, vector<6x32xbf16>, vector<2x32xf32> -> vector<2x32xf32>
    %48 = vector.broadcast %2 : vector<1x32xf32> to vector<2x32xf32>
    %49 = arith.addf %47, %48 : vector<2x32xf32>
    %cst_27 = arith.constant 0.000000e+00 : f32
    %50 = vector.broadcast %cst_27 : f32 to vector<2x32xf32>
    %51 = arith.maximumf %49, %50 : vector<2x32xf32>
    %52 = arith.truncf %24 : vector<2x32xf32> to vector<2x32xbf16>
    %53 = arith.truncf %44 : vector<2x32xf32> to vector<2x32xbf16>
    %54 = arith.truncf %51 : vector<2x32xf32> to vector<2x32xbf16>
    %55 = tpu.concatenate %52, %53, %54 in 1 : vector<2x32xbf16>, vector<2x32xbf16>, vector<2x32xbf16> -> vector<2x96xbf16>
    %c0_28 = arith.constant 0 : index
    %c0_29 = arith.constant 0 : index
    %56 = vector.load %arg7[%c0_28, %c0_29] : memref<96x64xbf16, #tpu.memory_space<vmem>>, vector<96x64xbf16>
    %cst_30 = arith.constant dense<0.000000e+00> : vector<2x64xf32>
    %57 = tpu.matmul %55, %56, %cst_30 {dimension_numbers = #tpu.dot_dimension_numbers<[1], [0], [0], [1], [0, 0, 1, 1], [], []>} : vector<2x96xbf16>, vector<96x64xbf16>, vector<2x64xf32> -> vector<2x64xf32>
    %58 = vector.broadcast %3 : vector<1x64xf32> to vector<2x64xf32>
    %59 = arith.addf %57, %58 : vector<2x64xf32>
    %cst_31 = arith.constant 0.000000e+00 : f32
    %60 = vector.broadcast %cst_31 : f32 to vector<2x64xf32>
    %61 = arith.maximumf %59, %60 : vector<2x64xf32>
    %c0_32 = arith.constant 0 : index
    %c0_33 = arith.constant 0 : index
    %62 = vector.load %arg8[%c0_32, %c0_33] : memref<1x64xf32, #tpu.memory_space<vmem>>, vector<1x64xf32>
    %63 = vector.broadcast %62 : vector<1x64xf32> to vector<2x64xf32>
    %64 = arith.mulf %61, %63 : vector<2x64xf32>
    %cst_34 = arith.constant dense<0.000000e+00> : vector<2xf32>
    %65 = vector.multi_reduction <add>, %64, %cst_34 [1] : vector<2x64xf32> to vector<2xf32>
    %66 = vector.shape_cast %65 : vector<2xf32> to vector<2x1xf32>
    %67 = vector.broadcast %4 : vector<1x1xf32> to vector<2x1xf32>
    %68 = arith.addf %66, %67 : vector<2x1xf32>
    %cst_35 = arith.constant 0.000000e+00 : f32
    %69 = vector.broadcast %cst_35 : f32 to vector<2x1xf32>
    %70 = arith.maximumf %68, %69 : vector<2x1xf32>
    %71 = vector.shape_cast %70 : vector<2x1xf32> to vector<2x1xf32>
    %72 = vector.broadcast %71 : vector<2x1xf32> to vector<2x128xf32>
    %c0_36 = arith.constant 0 : index
    %c0_37 = arith.constant 0 : index
    %73 = vector.load %arg10[%c0_36, %c0_37] : memref<2x128xf32, #tpu.memory_space<vmem>>, vector<2x128xf32>
    tpu.vector_store %arg10[%c0_36, %c0_37], %72 {strides = array<i32>} : memref<2x128xf32, #tpu.memory_space<vmem>>, vector<2x128xf32>,
    return
  }
  func.func @transform_0(%arg0: i32) -> (i32, i32) {
    %c0_i32 = arith.constant 0 : i32
    %c0_i32_0 = arith.constant 0 : i32
    return %arg0, %c0_i32 : i32, i32
  }
  func.func @transform_1(%arg0: i32) -> (i32, i32) {
    %c0_i32 = arith.constant 0 : i32
    %c0_i32_0 = arith.constant 0 : i32
    return %arg0, %c0_i32 : i32, i32
  }
  func.func @transform_2(%arg0: i32) -> (i32, i32) {
    %c0_i32 = arith.constant 0 : i32
    %c0_i32_0 = arith.constant 0 : i32
    return %arg0, %c0_i32 : i32, i32
  }
  func.func @transform_3(%arg0: i32) -> (i32, i32) {
    %c0_i32 = arith.constant 0 : i32
    %c0_i32_0 = arith.constant 0 : i32
    %c0_i32_1 = arith.constant 0 : i32
    return %c0_i32, %c0_i32_0 : i32, i32
  }
  func.func @transform_4(%arg0: i32) -> (i32, i32) {
    %c0_i32 = arith.constant 0 : i32
    %c0_i32_0 = arith.constant 0 : i32
    %c0_i32_1 = arith.constant 0 : i32
    return %c0_i32, %c0_i32_0 : i32, i32
  }
  func.func @transform_5(%arg0: i32) -> (i32, i32) {
    %c0_i32 = arith.constant 0 : i32
    %c0_i32_0 = arith.constant 0 : i32
    %c0_i32_1 = arith.constant 0 : i32
    return %c0_i32, %c0_i32_0 : i32, i32
  }
  func.func @transform_6(%arg0: i32) -> (i32, i32) {
    %c0_i32 = arith.constant 0 : i32
    %c0_i32_0 = arith.constant 0 : i32
    %c0_i32_1 = arith.constant 0 : i32
    return %c0_i32, %c0_i32_0 : i32, i32
  }
  func.func @transform_7(%arg0: i32) -> (i32, i32) {
    %c0_i32 = arith.constant 0 : i32
    %c0_i32_0 = arith.constant 0 : i32
    %c0_i32_1 = arith.constant 0 : i32
    return %c0_i32, %c0_i32_0 : i32, i32
  }
  func.func @transform_8(%arg0: i32) -> (i32, i32) {
    %c0_i32 = arith.constant 0 : i32
    %c0_i32_0 = arith.constant 0 : i32
    %c0_i32_1 = arith.constant 0 : i32
    return %c0_i32, %c0_i32_0 : i32, i32
  }
  func.func @transform_9(%arg0: i32) -> (i32, i32) {
    %c0_i32 = arith.constant 0 : i32
    %c0_i32_0 = arith.constant 0 : i32
    return %arg0, %c0_i32 : i32, i32
  }
}

</mosaic_0001>

<llo_original>
// kernel: three_inputs_net_forward.1
$region0: #{three_inputs_net_forward.1}
  #allocation0 [shape = 'u32[]', space=smem, size = 0x4, offset = 0x4, fixed_abs, tag = 'smem constant byte address 0x4 - core index']
  #allocation1 [shape = 'u32[144,128]{1,0:T(1,128)}', space=vmem, size = 0x12000, scoped, tag = 'internal scratch']
  %s0 = inlined_call_operand.vmem [shape: bf16[16,32], index: 0, kind: input, shape index: {}]
  %s1 = inlined_call_operand.vmem [shape: bf16[32,32], index: 1, kind: input, shape index: {}]
  %s2 = inlined_call_operand.vmem [shape: bf16[2,6], index: 2, kind: input, shape index: {}]
  %s3 = inlined_call_operand.vmem [shape: bf16[32,64], index: 3, kind: input, shape index: {}]
  %s4 = inlined_call_operand.vmem [shape: bf16[32,64], index: 4, kind: input, shape index: {}]
  %s5 = inlined_call_operand.vmem [shape: bf16[6,32], index: 5, kind: input, shape index: {}]
  %s6 = inlined_call_operand.vmem [shape: bf16[96,64], index: 6, kind: input, shape index: {}]
  %s7 = inlined_call_operand.vmem [shape: f32[1,64], index: 7, kind: input, shape index: {}]
  %s8 = inlined_call_operand.vmem [shape: f32[5,64], index: 8, kind: input, shape index: {}]
  %s9 = inlined_call_operand.vmem [shape: f32[2,128], index: 9, kind: output, shape index: {}]
  %s10 = sld [smem:[#allocation0]]
  $region46: #{three_inputs_net_forward.1} parent=0
    _
  %s12 = ssub.s32 1, %s10
  %s13 = scalar_select 0, %s12, %s10
  // Predicated region
  $region2: #{three_inputs_net_forward.1} parent=0 // pred_check
    _
  $region3: #{three_inputs_net_forward.1} parent=0 // pred_check_branch
    %15 = sbr.rel (0) target = $region5
  $region4: #{three_inputs_net_forward.1} parent=0 // pred_region
    _
  $region5: #{three_inputs_net_forward.1} parent=0 // pred_fallthru
    _
  // Predicated region
  $region6: #{three_inputs_net_forward.1} parent=0 // pred_check
    _
  $region7: #{three_inputs_net_forward.1} parent=0 // pred_check_branch
    %17 = sbr.rel (0) target = $region9
  $region8: #{three_inputs_net_forward.1} parent=0 // pred_region
    _
  $region9: #{three_inputs_net_forward.1} parent=0 // pred_fallthru
    _
  // Predicated region
  $region10: #{three_inputs_net_forward.1} parent=0 // pred_check
    _
  $region11: #{three_inputs_net_forward.1} parent=0 // pred_check_branch
    %19 = sbr.rel (0) target = $region13
  $region12: #{three_inputs_net_forward.1} parent=0 // pred_region
    _
  $region13: #{three_inputs_net_forward.1} parent=0 // pred_fallthru
    _
  // Predicated region
  $region14: #{three_inputs_net_forward.1} parent=0 // pred_check
    _
  $region15: #{three_inputs_net_forward.1} parent=0 // pred_check_branch
    %21 = sbr.rel (0) target = $region17
  $region16: #{three_inputs_net_forward.1} parent=0 // pred_region
    _
  $region17: #{three_inputs_net_forward.1} parent=0 // pred_fallthru
    _
  // Predicated region
  $region18: #{three_inputs_net_forward.1} parent=0 // pred_check
    _
  $region19: #{three_inputs_net_forward.1} parent=0 // pred_check_branch
    %23 = sbr.rel (0) target = $region21
  $region20: #{three_inputs_net_forward.1} parent=0 // pred_region
    _
  $region21: #{three_inputs_net_forward.1} parent=0 // pred_fallthru
    _
  // Predicated region
  $region22: #{three_inputs_net_forward.1} parent=0 // pred_check
    _
  $region23: #{three_inputs_net_forward.1} parent=0 // pred_check_branch
    %25 = sbr.rel (0) target = $region25
  $region24: #{three_inputs_net_forward.1} parent=0 // pred_region
    _
  $region25: #{three_inputs_net_forward.1} parent=0 // pred_fallthru
    _
  // Predicated region
  $region26: #{three_inputs_net_forward.1} parent=0 // pred_check
    _
  $region27: #{three_inputs_net_forward.1} parent=0 // pred_check_branch
    %27 = sbr.rel (0) target = $region29
  $region28: #{three_inputs_net_forward.1} parent=0 // pred_region
    _
  $region29: #{three_inputs_net_forward.1} parent=0 // pred_fallthru
    _
  // Predicated region
  $region30: #{three_inputs_net_forward.1} parent=0 // pred_check
    _
  $region31: #{three_inputs_net_forward.1} parent=0 // pred_check_branch
    %29 = sbr.rel (0) target = $region33
  $region32: #{three_inputs_net_forward.1} parent=0 // pred_region
    _
  $region33: #{three_inputs_net_forward.1} parent=0 // pred_fallthru
    _
  // Predicated region
  $region34: #{three_inputs_net_forward.1} parent=0 // pred_check
    _
  $region35: #{three_inputs_net_forward.1} parent=0 // pred_check_branch
    %31 = sbr.rel (0) target = $region37
  $region36: #{three_inputs_net_forward.1} parent=0 // pred_region
    _
  $region37: #{three_inputs_net_forward.1} parent=0 // pred_fallthru
    _
  %v33 = vld [vmem:[%s8] sm:$0x1]
  %v34 = vld [vmem:[%s8 + $0x1] sm:$0x1]
  %v35 = vld [vmem:[%s8 + $0x2] sm:$0x1]
  %v36 = vld [vmem:[%s8 + $0x3] sm:$0x1]
  %v37 = vld [vmem:[%s8 + $0x4] sm:$0x1]
  %v38 = vld [vmem:[%s0] sm:$0xf]
  %v39 = vld [vmem:[%s0 + $0x4] sm:$0xf]
  %v40 = vld [vmem:[%s3] sm:$0xf]
  %v41 = vld [vmem:[%s3 + $0x4] sm:$0xf]
  %v42 = vld [vmem:[%s3 + $0x8] sm:$0xf]
  %v43 = vld [vmem:[%s3 + $0xc] sm:$0xf]
  %v46 = vunpack.c.l.b16 %v38
  %v47 = vunpack.c.l.b16 %v39
  %v48 = vpack.c.b16 %v47, %v46
  %v53 = vunpack.c.l.b16 %v40
  %v54 = vunpack.c.l.b16 %v41
  %v55 = vunpack.c.l.b16 %v42
  %v56 = vunpack.c.l.b16 %v43
  %v57 = vpack.c.b16 %v54, %v53
  %v58 = vpack.c.b16 %v56, %v55
  %vm61 = vcmask 261120
  %v63 = vsel %vm61, %v48, 0
  %65 = vmatprep.subr.bf16.mxu0 0
  %66 = vmatpush1.bf16.msra.mxu0 0
  %67 = vmatprep.subr.bf16.mxu0 0
  %68 = vmatpush1.bf16.msra.mxu0 0
  %69 = vmatprep.subr.bf16.mxu0 0
  %70 = vmatpush1.bf16.msra.mxu0 0
  %71 = vmatprep.subr.bf16.mxu0 0
  %72 = vmatpush1.bf16.msra.mxu0 0
  %73 = vmatprep.subr.bf16.mxu0 0
  %74 = vmatpush1.bf16.msra.mxu0 0
  %75 = vmatprep.subr.bf16.mxu0 0
  %76 = vmatpush1.bf16.msra.mxu0 0
  %77 = vmatprep.subr.bf16.mxu0 0
  %78 = vmatpush1.bf16.msra.mxu0 %v58
  %79 = vmatprep.subr.bf16.mxu0 0
  %80 = vmatpush1.bf16.msra.mxu0 %v57
  %81 = vmatprep.subr.bf16.mxu0 0
  %82 = vmatpush2.bf16.msra.mxu0 0
  %83 = vmatprep.subr.bf16.mxu0 0
  %84 = vmatpush2.bf16.msra.mxu0 0
  %85 = vmatprep.subr.bf16.mxu0 0
  %86 = vmatpush2.bf16.msra.mxu0 0
  %87 = vmatprep.subr.bf16.mxu0 0
  %88 = vmatpush2.bf16.msra.mxu0 0
  %89 = vmatprep.subr.bf16.mxu0 0
  %90 = vmatpush2.bf16.msra.mxu0 0
  %91 = vmatprep.subr.bf16.mxu0 0
  %92 = vmatpush2.bf16.msra.mxu0 0
  %93 = vmatprep.subr.bf16.mxu0 0
  %94 = vmatpush2.bf16.msra.mxu0 0
  %95 = vmatprep.subr.bf16.mxu0 0
  %96 = vmatpush2.bf16.msra.mxu0 0
  %97 = vmatprep.mubr.bf16.mxu0 0
  %98 = vmatmul.mubr.bf16.gmra.mxu0 %v63
  %v99 = vpop.f32.mrf.mxu0
  %v100 = vadd.f32 0.0, %v99
  %v101 = vpop.f32.mrf.mxu0
  %v102 = vpop.f32.mrf.mxu0
  %v103 = vadd.f32 0.0, %v102
  %v104 = vpop.f32.mrf.mxu0
  %105 = vdwg.mxu0
  %108 = vrot.lane.b32.xlu0 %v100, 96
  %v109 = vpop.permute.xlu0 %108
  %110 = vrot.lane.b32.xlu0 %v103, 96
  %v111 = vpop.permute.xlu0 %110
  %v114 = vrot.slane %v109, 1
  %v115 = vrot.slane %v111, 1
  %v116 = vlaneseq
  %v117 = vshrl.u32 %v116, 7
  %vm118 = vcmp.lt.s32.totalorder %v117, 7
  %v119 = vsel %vm118, %v114, %v115
  %v120 = vsel %vm118, %v115, %v114
  %v121 = vadd.f32 %v100, %v119
  %v122 = vadd.f32 %v103, %v120
  %v123 = vlaneseq
  %v124 = vshrl.u32 %v123, 7
  %v125 = vsub.s32 0, %v124
  %v126 = vrot.slane %v33, %v125
  %v127 = vadd.f32 %v121, %v126
  %v128 = vadd.f32 %v122, %v126
  %v129 = vmax.f32 %v127, 0.0
  %v130 = vmax.f32 %v128, 0.0
  %v131 = vsel %vm118, %v129, 0.0
  %v132 = vsel %vm118, %v130, 0.0
  %v133 = vsel %vm61, %v131, 0.0
  %v134 = vrot.slane %v133, 4
  %v135 = vadd.f32 %v133, %v134
  %v136 = vrot.slane %v135, 2
  %v137 = vadd.f32 %v135, %v136
  %v138 = vrot.slane %v137, 1
  %v139 = vadd.f32 %v137, %v138
  %v140 = vsel %vm61, %v132, 0.0
  %v141 = vrot.slane %v140, 4
  %v142 = vadd.f32 %v140, %v141
  %v143 = vrot.slane %v142, 2
  %v144 = vadd.f32 %v142, %v143
  %v145 = vrot.slane %v144, 1
  %v146 = vadd.f32 %v144, %v145
  %v147 = vmul.f32 %v139, 0.14285715
  %v148 = vmul.f32 %v146, 0.14285715
  %v149 = vld [vmem:[%s1] sm:$0xf]
  %v150 = vld [vmem:[%s1 + $0x4] sm:$0xf]
  %v151 = vld [vmem:[%s1 + $0x8] sm:$0xf]
  %v152 = vld [vmem:[%s1 + $0xc] sm:$0xf]
  %v153 = vld [vmem:[%s4] sm:$0xf]
  %v154 = vld [vmem:[%s4 + $0x4] sm:$0xf]
  %v155 = vld [vmem:[%s4 + $0x8] sm:$0xf]
  %v156 = vld [vmem:[%s4 + $0xc] sm:$0xf]
  %v161 = vunpack.c.l.b16 %v149
  %v162 = vunpack.c.l.b16 %v150
  %v163 = vunpack.c.l.b16 %v151
  %v164 = vunpack.c.l.b16 %v152
  %v165 = vpack.c.b16 %v162, %v161
  %v166 = vpack.c.b16 %v164, %v163
  %v171 = vunpack.c.l.b16 %v153
  %v172 = vunpack.c.l.b16 %v154
  %v173 = vunpack.c.l.b16 %v155
  %v174 = vunpack.c.l.b16 %v156
  %v175 = vpack.c.b16 %v172, %v171
  %v176 = vpack.c.b16 %v174, %v173
  %v180 = vsel %vm61, %v165, 0
  %v183 = vsel %vm61, %v166, 0
  %185 = vmatprep.subr.bf16.mxu0 0
  %186 = vmatpush1.bf16.msra.mxu0 0
  %187 = vmatprep.subr.bf16.mxu0 0
  %188 = vmatpush1.bf16.msra.mxu0 0
  %189 = vmatprep.subr.bf16.mxu0 0
  %190 = vmatpush1.bf16.msra.mxu0 0
  %191 = vmatprep.subr.bf16.mxu0 0
  %192 = vmatpush1.bf16.msra.mxu0 0
  %193 = vmatprep.subr.bf16.mxu0 0
  %194 = vmatpush1.bf16.msra.mxu0 0
  %195 = vmatprep.subr.bf16.mxu0 0
  %196 = vmatpush1.bf16.msra.mxu0 0
  %197 = vmatprep.subr.bf16.mxu0 0
  %198 = vmatpush1.bf16.msra.mxu0 %v176
  %199 = vmatprep.subr.bf16.mxu0 0
  %200 = vmatpush1.bf16.msra.mxu0 %v175
  %201 = vmatprep.subr.bf16.mxu0 0
  %202 = vmatpush2.bf16.msra.mxu0 0
  %203 = vmatprep.subr.bf16.mxu0 0
  %204 = vmatpush2.bf16.msra.mxu0 0
  %205 = vmatprep.subr.bf16.mxu0 0
  %206 = vmatpush2.bf16.msra.mxu0 0
  %207 = vmatprep.subr.bf16.mxu0 0
  %208 = vmatpush2.bf16.msra.mxu0 0
  %209 = vmatprep.subr.bf16.mxu0 0
  %210 = vmatpush2.bf16.msra.mxu0 0
  %211 = vmatprep.subr.bf16.mxu0 0
  %212 = vmatpush2.bf16.msra.mxu0 0
  %213 = vmatprep.subr.bf16.mxu0 0
  %214 = vmatpush2.bf16.msra.mxu0 0
  %215 = vmatprep.subr.bf16.mxu0 0
  %216 = vmatpush2.bf16.msra.mxu0 0
  %217 = vmatprep.mubr.bf16.mxu0 0
  %218 = vmatmul.mubr.bf16.gmra.mxu0 %v180
  %v219 = vpop.f32.mrf.mxu0
  %v220 = vadd.f32 0.0, %v219
  %v221 = vpop.f32.mrf.mxu0
  %v222 = vpop.f32.mrf.mxu0
  %v223 = vadd.f32 0.0, %v222
  %v224 = vpop.f32.mrf.mxu0
  %225 = vmatprep.mubr.bf16.mxu0 0
  %226 = vmatmul.mubr.bf16.gmra.mxu0 %v183
  %v227 = vpop.f32.mrf.mxu0
  %v228 = vadd.f32 0.0, %v227
  %v229 = vpop.f32.mrf.mxu0
  %v230 = vpop.f32.mrf.mxu0
  %v231 = vadd.f32 0.0, %v230
  %v232 = vpop.f32.mrf.mxu0
  %233 = vdwg.mxu0
  %238 = vrot.lane.b32.xlu0 %v220, 96
  %v239 = vpop.permute.xlu0 %238
  %240 = vrot.lane.b32.xlu0 %v223, 96
  %v241 = vpop.permute.xlu0 %240
  %242 = vrot.lane.b32.xlu0 %v228, 96
  %v243 = vpop.permute.xlu0 %242
  %244 = vrot.lane.b32.xlu0 %v231, 96
  %v245 = vpop.permute.xlu0 %244
  %v250 = vrot.slane %v239, 1
  %v251 = vrot.slane %v241, 1
  %v252 = vrot.slane %v243, 1
  %v253 = vrot.slane %v245, 1
  %v254 = vsel %vm118, %v252, %v253
  %v255 = vsel %vm118, %v251, %v252
  %v256 = vsel %vm118, %v250, %v251
  %v257 = vsel %vm118, %v253, %v250
  %v258 = vadd.f32 %v220, %v256
  %v259 = vadd.f32 %v223, %v255
  %v260 = vadd.f32 %v228, %v254
  %v261 = vadd.f32 %v231, %v257
  %v262 = vlaneseq
  %v263 = vshrl.u32 %v262, 7
  %v264 = vsub.s32 0, %v263
  %v265 = vrot.slane %v34, %v264
  %v266 = vadd.f32 %v258, %v265
  %v267 = vadd.f32 %v259, %v265
  %v268 = vadd.f32 %v260, %v265
  %v269 = vadd.f32 %v261, %v265
  %v270 = vmax.f32 %v266, 0.0
  %v271 = vmax.f32 %v267, 0.0
  %v272 = vmax.f32 %v268, 0.0
  %v273 = vmax.f32 %v269, 0.0
  %v274 = vadd.s32 %v117, 8
  %vm275 = vcmp.lt.s32.totalorder %v117, 11
  %vm276 = vcmp.lt.s32.totalorder %v274, 11
  %v277 = vsel %vm275, %v270, 0.0
  %v278 = vsel %vm276, %v271, 0.0
  %v279 = vsel %vm275, %v272, 0.0
  %v280 = vsel %vm276, %v273, 0.0
  %v281 = vsel %vm61, %v277, 0.0
  %v282 = vsel %vm61, %v278, 0.0
  %v283 = vadd.f32 %v281, %v282
  %v284 = vrot.slane %v283, 4
  %v285 = vadd.f32 %v283, %v284
  %v286 = vrot.slane %v285, 2
  %v287 = vadd.f32 %v285, %v286
  %v288 = vrot.slane %v287, 1
  %v289 = vadd.f32 %v287, %v288
  %v290 = vsel %vm61, %v279, 0.0
  %v291 = vsel %vm61, %v280, 0.0
  %v292 = vadd.f32 %v290, %v291
  %v293 = vrot.slane %v292, 4
  %v294 = vadd.f32 %v292, %v293
  %v295 = vrot.slane %v294, 2
  %v296 = vadd.f32 %v294, %v295
  %v297 = vrot.slane %v296, 1
  %v298 = vadd.f32 %v296, %v297
  %v299 = vmul.f32 %v289, 0.09090909
  %v300 = vmul.f32 %v298, 0.09090909
  %v301 = vld [vmem:[%s2] sm:$0x1]
  %v302 = vld [vmem:[%s5] sm:$0x7]
  %v303 = vlaneseq
  %v304 = vshrl.u32 %v303, 7
  %v305 = vsub.s32 0, %v304
  %v306 = vrot.slane %v35, %v305
  %vm307 = vcmask 48128
  %v309 = vsel %vm307, %v301, 0
  %vm311 = vcmask 1042432
  %v313 = vsel %vm311, %v302, 0
  %315 = vmatprep.subr.bf16.mxu0 0
  %316 = vmatpush1.bf16.msra.mxu0 0
  %317 = vmatprep.subr.bf16.mxu0 0
  %318 = vmatpush1.bf16.msra.mxu0 0
  %319 = vmatprep.subr.bf16.mxu0 0
  %320 = vmatpush1.bf16.msra.mxu0 0
  %321 = vmatprep.subr.bf16.mxu0 0
  %322 = vmatpush1.bf16.msra.mxu0 0
  %323 = vmatprep.subr.bf16.mxu0 0
  %324 = vmatpush1.bf16.msra.mxu0 0
  %325 = vmatprep.subr.bf16.mxu0 0
  %326 = vmatpush1.bf16.msra.mxu0 0
  %327 = vmatprep.subr.bf16.mxu0 0
  %328 = vmatpush1.bf16.msra.mxu0 0
  %329 = vmatprep.subr.bf16.mxu0 0
  %330 = vmatpush1.bf16.msra.mxu0 %v313
  %331 = vmatprep.subr.bf16.mxu0 0
  %332 = vmatpush2.bf16.msra.mxu0 0
  %333 = vmatprep.subr.bf16.mxu0 0
  %334 = vmatpush2.bf16.msra.mxu0 0
  %335 = vmatprep.subr.bf16.mxu0 0
  %336 = vmatpush2.bf16.msra.mxu0 0
  %337 = vmatprep.subr.bf16.mxu0 0
  %338 = vmatpush2.bf16.msra.mxu0 0
  %339 = vmatprep.subr.bf16.mxu0 0
  %340 = vmatpush2.bf16.msra.mxu0 0
  %341 = vmatprep.subr.bf16.mxu0 0
  %342 = vmatpush2.bf16.msra.mxu0 0
  %343 = vmatprep.subr.bf16.mxu0 0
  %344 = vmatpush2.bf16.msra.mxu0 0
  %345 = vmatprep.subr.bf16.mxu0 0
  %346 = vmatpush2.bf16.msra.mxu0 0
  %347 = vmatprep.mubr.bf16.mxu0 0
  %348 = vmatmul.mubr.bf16.gmra.mxu0 %v309
  %v349 = vpop.f32.mrf.mxu0
  %v350 = vadd.f32 %v306, %v349
  %v351 = vpop.f32.mrf.mxu0
  %v352 = vpop.f32.mrf.mxu0
  %v353 = vpop.f32.mrf.mxu0
  %354 = vdwg.mxu0
  %v355 = vmax.f32 %v350, 0.0
  %v356 = vpack.c.bf16 %v147, %v147
  %v357 = vpack.c.bf16 %v148, %v148
  %v358 = vpack.c.bf16 %v299, %v299
  %v359 = vpack.c.bf16 %v300, %v300
  %v360 = vpack.c.bf16 %v355, %v355
  %v363 = vunpack.c.l.b16 %v356
  %v364 = vunpack.c.l.b16 %v357
  %vm365 = vcmask 1041409
  %v366 = vsel %vm365, %v364, %v363
  %v367 = vpack.c.b16 %v366, %v366
  %v370 = vunpack.c.l.b16 %v358
  %v371 = vunpack.c.l.b16 %v359
  %v372 = vsel %vm365, %v371, %v370
  %v373 = vpack.c.b16 %v372, %v372
  %374 = vrot.lane.b32.xlu0 %v373, 32
  %v375 = vpop.permute.xlu0 %374
  %377 = vrot.lane.b32.xlu0 %v360, 64
  %v378 = vpop.permute.xlu0 %377
  %v381 = vsel %vm61, %v367, %v375
  %vm382 = vcmask 523264
  %v384 = vsel %vm382, %v381, %v378
  %v385 = vld [vmem:[%s6] sm:$0xf]
  %v386 = vld [vmem:[%s6 + $0x4] sm:$0xf]
  %v387 = vld [vmem:[%s6 + $0x8] sm:$0xf]
  %v388 = vld [vmem:[%s6 + $0xc] sm:$0xf]
  %v389 = vld [vmem:[%s6 + $0x10] sm:$0xf]
  %v390 = vld [vmem:[%s6 + $0x14] sm:$0xf]
  %v391 = vld [vmem:[%s6 + $0x18] sm:$0xf]
  %v392 = vld [vmem:[%s6 + $0x1c] sm:$0xf]
  %v393 = vld [vmem:[%s6 + $0x20] sm:$0xf]
  %v394 = vld [vmem:[%s6 + $0x24] sm:$0xf]
  %v395 = vld [vmem:[%s6 + $0x28] sm:$0xf]
  %v396 = vld [vmem:[%s6 + $0x2c] sm:$0xf]
  %v397 = vlaneseq
  %v398 = vshrl.u32 %v397, 7
  %v399 = vsub.s32 0, %v398
  %v400 = vrot.slane %v36, %v399
  %v413 = vunpack.c.l.b16 %v385
  %v414 = vunpack.c.l.b16 %v386
  %v415 = vunpack.c.l.b16 %v387
  %v416 = vunpack.c.l.b16 %v388
  %v417 = vunpack.c.l.b16 %v389
  %v418 = vunpack.c.l.b16 %v390
  %v419 = vunpack.c.l.b16 %v391
  %v420 = vunpack.c.l.b16 %v392
  %v421 = vunpack.c.l.b16 %v393
  %v422 = vunpack.c.l.b16 %v394
  %v423 = vunpack.c.l.b16 %v395
  %v424 = vunpack.c.l.b16 %v396
  %v425 = vpack.c.b16 %v414, %v413
  %v426 = vpack.c.b16 %v416, %v415
  %v427 = vpack.c.b16 %v418, %v417
  %v428 = vpack.c.b16 %v420, %v419
  %v429 = vpack.c.b16 %v422, %v421
  %v430 = vpack.c.b16 %v424, %v423
  %vm437 = vcmask 785408
  %v438 = vsel %vm437, %v384, 0
  %440 = vmatprep.subr.bf16.mxu0 0
  %441 = vmatpush1.bf16.msra.mxu0 0
  %442 = vmatprep.subr.bf16.mxu0 0
  %443 = vmatpush1.bf16.msra.mxu0 0
  %444 = vmatprep.subr.bf16.mxu0 0
  %445 = vmatpush1.bf16.msra.mxu0 %v430
  %446 = vmatprep.subr.bf16.mxu0 0
  %447 = vmatpush1.bf16.msra.mxu0 %v429
  %448 = vmatprep.subr.bf16.mxu0 0
  %449 = vmatpush1.bf16.msra.mxu0 %v428
  %450 = vmatprep.subr.bf16.mxu0 0
  %451 = vmatpush1.bf16.msra.mxu0 %v427
  %452 = vmatprep.subr.bf16.mxu0 0
  %453 = vmatpush1.bf16.msra.mxu0 %v426
  %454 = vmatprep.subr.bf16.mxu0 0
  %455 = vmatpush1.bf16.msra.mxu0 %v425
  %456 = vmatprep.subr.bf16.mxu0 0
  %457 = vmatpush2.bf16.msra.mxu0 0
  %458 = vmatprep.subr.bf16.mxu0 0
  %459 = vmatpush2.bf16.msra.mxu0 0
  %460 = vmatprep.subr.bf16.mxu0 0
  %461 = vmatpush2.bf16.msra.mxu0 0
  %462 = vmatprep.subr.bf16.mxu0 0
  %463 = vmatpush2.bf16.msra.mxu0 0
  %464 = vmatprep.subr.bf16.mxu0 0
  %465 = vmatpush2.bf16.msra.mxu0 0
  %466 = vmatprep.subr.bf16.mxu0 0
  %467 = vmatpush2.bf16.msra.mxu0 0
  %468 = vmatprep.subr.bf16.mxu0 0
  %469 = vmatpush2.bf16.msra.mxu0 0
  %470 = vmatprep.subr.bf16.mxu0 0
  %471 = vmatpush2.bf16.msra.mxu0 0
  %472 = vmatprep.mubr.bf16.mxu0 0
  %473 = vmatmul.mubr.bf16.gmra.mxu0 %v438
  %v474 = vpop.f32.mrf.mxu0
  %v475 = vadd.f32 %v400, %v474
  %v476 = vpop.f32.mrf.mxu0
  %v477 = vpop.f32.mrf.mxu0
  %v478 = vpop.f32.mrf.mxu0
  %479 = vdwg.mxu0
  %v480 = vmax.f32 %v475, 0.0
  %v481 = vld [vmem:[%s7] sm:$0x1]
  %v483 = vlaneseq
  %v484 = vshrl.u32 %v483, 7
  %v485 = vsub.s32 0, %v484
  %v486 = vrot.slane %v481, %v485
  %v488 = vmul.f32 %v480, %v486
  %vm489 = vcmask 517120
  %v490 = vsel %vm489, %v488, 0.0
  %491 = vadd.xlane.f32.xlu0 %v490
  %v492 = vpop.xlane.xlu0 %491
  %v493 = vlaneseq
  %v494 = vshrl.u32 %v493, 7
  %v495 = vsub.s32 0, %v494
  %v496 = vrot.slane %v37, %v495
  %v497 = vadd.f32 %v492, %v496
  %v498 = vmax.f32 %v497, 0.0
  %500 = vset.pattern.permute.xlu0 0
  %501 = vperm.xlu0 %500, %v498
  %v502 = vpop.permute.xlu0 %501
  %504 = vst [vmem:[%s9] sm:$0x3] %v502
  // Predicated region
  $region38: #{three_inputs_net_forward.1} parent=0 // pred_check
    _
  $region39: #{three_inputs_net_forward.1} parent=0 // pred_check_branch
    %506 = sbr.rel (0) target = $region41
  $region40: #{three_inputs_net_forward.1} parent=0 // pred_region
    _
  $region41: #{three_inputs_net_forward.1} parent=0 // pred_fallthru
    _
  // Predicated region
  $region42: #{three_inputs_net_forward.1} parent=0 // pred_check
    _
  $region43: #{three_inputs_net_forward.1} parent=0 // pred_check_branch
    %508 = sbr.rel (0) target = $region45
  $region44: #{three_inputs_net_forward.1} parent=0 // pred_region
    _
  $region45: #{three_inputs_net_forward.1} parent=0 // pred_fallthru
    _

</llo_original>
